<compile_context>
chip_gen: v7x
topology: tpu7x:2x2x1
jax: 0.10.0
libtpu: 0.0.40
codegen_flags: <defaults>
</compile_context>

<pallas_src>
import warnings

import jax
import jax.numpy as jnp
from jax.experimental import pallas as pl
from jax.experimental.pallas import tpu as pltpu

_LANES = 128
_MAX_TILE_ROWS = 1024      # (1024, 128) f32 tile = 512 KiB; ~1 MiB double-buffered
_NUM_SHARDS = 2            # leading "parallel" axis (one half per TensorCore on v7x)


def _round_up(x, m):
    return -(-x // m) * m


def _sumsq_kernel(x_ref, out_ref, acc_ref):
    """Streaming sum(x^2) over grid=(shard, tile); tile axis is the reduction."""
    i = pl.program_id(1)

    @pl.when(i == 0)
    def _():
        acc_ref[...] = jnp.zeros_like(acc_ref)

    x = x_ref[...]
    acc_ref[...] += x * x          # elementwise per step (no per-step XLU reduce)

    @pl.when(i == pl.num_programs(1) - 1)
    def _():
        # Single cross-lane/sublane reduction per shard, done once at the end.
        out_ref[...] = jnp.sum(acc_ref[...]).reshape(1, 1, 1)


def _sum_of_squares(flat):
    """sum(flat**2) for a 1-D float32 array via a tiled Pallas reduction."""
    m = flat.shape[0]
    rows_needed = max(1, -(-m // _LANES))
    tile_rows = min(_MAX_TILE_ROWS, _round_up(rows_needed, 8))
    rows = _round_up(rows_needed, tile_rows * _NUM_SHARDS)
    tiles_per_shard = rows // (tile_rows * _NUM_SHARDS)

    padded = rows * _LANES
    # Pad + reshape fuse with the elementwise producer of `flat`; the padded
    # tail is zero, so it contributes nothing to the sum of squares.
    slab = jnp.pad(flat, (0, padded - m)).reshape(rows, _LANES)

    partials = pl.pallas_call(
        _sumsq_kernel,
        out_shape=jax.ShapeDtypeStruct((_NUM_SHARDS, 1, 1), jnp.float32),
        grid_spec=pltpu.PrefetchScalarGridSpec(
            num_scalar_prefetch=0,
            grid=(_NUM_SHARDS, tiles_per_shard),
            in_specs=[
                pl.BlockSpec(
                    (tile_rows, _LANES),
                    lambda c, i: (c * tiles_per_shard + i, 0),
                ),
            ],
            out_specs=pl.BlockSpec((1, 1, 1), lambda c, i: (c, 0, 0)),
            scratch_shapes=[pltpu.VMEM((tile_rows, _LANES), jnp.float32)],
        ),
        compiler_params=pltpu.CompilerParams(
            dimension_semantics=("parallel", "arbitrary"),
        ),
    )(slab)

    return jnp.sum(partials)


@jax.jit
def complex_mse_loss(inp, target):
    """Pallas implementation of ComplexMSELoss.forward: mean(|input - target|^2)."""
    if target.shape != inp.shape:
        warnings.warn(
            "Using a target size ({}) that is different to the input size ({}). "
            "This will likely lead to incorrect results due to broadcasting. "
            "Please ensure they have the same size.".format(target.shape, inp.shape),
            stacklevel=2,
        )

    if jnp.iscomplexobj(inp) or jnp.iscomplexobj(target):
        d = inp - target                                   # complex difference (XLA-fused)
        dr = jnp.real(d).astype(jnp.float32).reshape(-1)
        di = jnp.imag(d).astype(jnp.float32).reshape(-1)
        n = dr.shape[0]                                    # element count of the broadcast shape
        flat = jnp.concatenate([dr, di])
    else:
        d = inp.astype(jnp.float32) - target.astype(jnp.float32)
        flat = d.reshape(-1)
        n = flat.shape[0]

    total = _sum_of_squares(flat)
    return (total / jnp.float32(n)).astype(jnp.float32)


if __name__ == "__main__":
    key = jax.random.PRNGKey(0)
    k1, k2, k3, k4 = jax.random.split(key, 4)

    shape = (2, 4, 16, 16)  # NCHW
    inp = (jax.random.normal(k1, shape, dtype=jnp.float32)
           + 1j * jax.random.normal(k2, shape, dtype=jnp.float32)).astype(jnp.complex64)
    tgt = (jax.random.normal(k3, shape, dtype=jnp.float32)
           + 1j * jax.random.normal(k4, shape, dtype=jnp.float32)).astype(jnp.complex64)

    loss = complex_mse_loss(inp, tgt)
    jax.block_until_ready(loss)

    ref = jnp.mean(jnp.abs(inp - tgt).astype(jnp.float32) ** 2)
    assert jnp.allclose(loss, ref, rtol=1e-5, atol=1e-6), (loss, ref)

    # Also exercise the real-dtype path with a ragged (padded) size.
    kr1, kr2 = jax.random.split(k1)
    a = jax.random.normal(kr1, (3, 5, 7), dtype=jnp.float32)
    b = jax.random.normal(kr2, (3, 5, 7), dtype=jnp.float32)
    loss_r = complex_mse_loss(a, b)
    jax.block_until_ready(loss_r)
    ref_r = jnp.mean((a - b) ** 2)
    assert jnp.allclose(loss_r, ref_r, rtol=1e-5, atol=1e-6), (loss_r, ref_r)

    print("KERNEL_OK")
</pallas_src>

<mosaic_0001>
module attributes {stable_mosaic.version = 11 : i64} {
  func.func @_sumsq_kernel(%arg0: i32, %arg1: i32, %arg2: memref<32x128xf32, #tpu.memory_space<vmem>>, %arg3: memref<1x1x1xf32, #tpu.memory_space<vmem>>, %arg4: memref<32x128xf32, #tpu.memory_space<vmem>>) attributes {dimension_semantics = [#tpu.dimension_semantics<parallel>, #tpu.dimension_semantics<arbitrary>], iteration_bounds = array<i64: 2, 1>, scalar_prefetch = 0 : i64, scratch_operands = 1 : i64, tpu.core_type = #tpu.core_type<tc>, window_params = [{transform_indices = @transform_0, window_bounds = array<i64: 32, 128>}, {transform_indices = @transform_1, window_bounds = array<i64: 1, 1, 1>}]} {
    %c0_i32 = arith.constant 0 : i32
    %0 = arith.cmpi eq, %arg1, %c0_i32 : i32
    %1 = arith.extui %0 : i1 to i32
    %c0_i32_0 = arith.constant 0 : i32
    %2 = arith.cmpi ne, %1, %c0_i32_0 : i32
    scf.if %2 {
      %cst = arith.constant 0.000000e+00 : f32
      %11 = vector.broadcast %cst : f32 to vector<32x128xf32>
      %c0_8 = arith.constant 0 : index
      %c0_9 = arith.constant 0 : index
      %12 = vector.load %arg4[%c0_8, %c0_9] : memref<32x128xf32, #tpu.memory_space<vmem>>, vector<32x128xf32>
      tpu.vector_store %arg4[%c0_8, %c0_9], %11 {strides = array<i32>} : memref<32x128xf32, #tpu.memory_space<vmem>>, vector<32x128xf32>,
    } else {
    }
    %c0 = arith.constant 0 : index
    %c0_1 = arith.constant 0 : index
    %3 = vector.load %arg2[%c0, %c0_1] : memref<32x128xf32, #tpu.memory_space<vmem>>, vector<32x128xf32>
    %c0_2 = arith.constant 0 : index
    %c0_3 = arith.constant 0 : index
    %4 = vector.load %arg4[%c0_2, %c0_3] : memref<32x128xf32, #tpu.memory_space<vmem>>, vector<32x128xf32>
    %5 = arith.mulf %3, %3 : vector<32x128xf32>
    %6 = arith.addf %4, %5 : vector<32x128xf32>
    %c0_4 = arith.constant 0 : index
    %c0_5 = arith.constant 0 : index
    %7 = vector.load %arg4[%c0_4, %c0_5] : memref<32x128xf32, #tpu.memory_space<vmem>>, vector<32x128xf32>
    tpu.vector_store %arg4[%c0_4, %c0_5], %6 {strides = array<i32>} : memref<32x128xf32, #tpu.memory_space<vmem>>, vector<32x128xf32>,
    %c0_i32_6 = arith.constant 0 : i32
    %8 = arith.cmpi eq, %arg1, %c0_i32_6 : i32
    %9 = arith.extui %8 : i1 to i32
    %c0_i32_7 = arith.constant 0 : i32
    %10 = arith.cmpi ne, %9, %c0_i32_7 : i32
    scf.if %10 {
      %c0_8 = arith.constant 0 : index
      %c0_9 = arith.constant 0 : index
      %11 = vector.load %arg4[%c0_8, %c0_9] : memref<32x128xf32, #tpu.memory_space<vmem>>, vector<32x128xf32>
      %12 = vector.shape_cast %11 : vector<32x128xf32> to vector<1x32x128xf32>
      %cst = arith.constant dense<0.000000e+00> : vector<1xf32>
      %13 = vector.multi_reduction <add>, %12, %cst [1, 2] : vector<1x32x128xf32> to vector<1xf32>
      %14 = vector.shape_cast %13 : vector<1xf32> to vector<1x1x1xf32>
      %15 = vector.extract %14[0, 0, 0] : f32 from vector<1x1x1xf32>
      %16 = vector.broadcast %15 : f32 to vector<1x1x1xf32>
      %c0_10 = arith.constant 0 : index
      %c0_11 = arith.constant 0 : index
      %c0_12 = arith.constant 0 : index
      %17 = vector.load %arg3[%c0_10, %c0_11, %c0_12] : memref<1x1x1xf32, #tpu.memory_space<vmem>>, vector<1x1x1xf32>
      tpu.vector_store %arg3[%c0_10, %c0_11, %c0_12], %16 {strides = array<i32>} : memref<1x1x1xf32, #tpu.memory_space<vmem>>, vector<1x1x1xf32>,
    } else {
    }
    return
  }
  func.func @transform_0(%arg0: i32, %arg1: i32) -> (i32, i32) {
    %c1_i32 = arith.constant 1 : i32
    %0 = arith.muli %arg0, %c1_i32 : i32
    %1 = arith.addi %0, %arg1 : i32
    %c0_i32 = arith.constant 0 : i32
    %c0_i32_0 = arith.constant 0 : i32
    return %1, %c0_i32 : i32, i32
  }
  func.func @transform_1(%arg0: i32, %arg1: i32) -> (i32, i32, i32) {
    %c0_i32 = arith.constant 0 : i32
    %c0_i32_0 = arith.constant 0 : i32
    %c0_i32_1 = arith.constant 0 : i32
    return %arg0, %c0_i32, %c0_i32_0 : i32, i32, i32
  }
}

</mosaic_0001>

<llo_original>
// kernel: custom-call.1
$region0: #{custom-call.1}
  %s0 = inlined_call_operand.hbm [shape: c64[2,4,16,16], index: 0, kind: input, shape index: {}]
  %s1 = inlined_call_operand.vmem [shape: f32[2,4,16,16], index: 1, kind: output, shape index: {}]
  %s2 = scalar_lea.hbm %s0, 2048
  $region1: #{custom-call.1} parent=0
    #allocation0 [shape = 's32[1]{0}', space=sflag, size = 0x4, scoped, tag = 'scoped memory for custom-call.1']
    %3 = vsyncpa [#allocation0], 0
    %s4 = sshll.u32 %s1, 4
    %s5 = int_to_ptr.vmem [resolvable:$true] %s4
    %7 = dma.hbm_to_vmem [thread:$0]  %s2, 2048, %s5, [#allocation0]
    %8 = dma.done [#allocation0], 2048
    %9 = vsyncpa [#allocation0], 1

// kernel: custom-call
$region0: #{custom-call}
  %s0 = inlined_call_operand.hbm [shape: c64[2,4,16,16], index: 0, kind: input, shape index: {}]
  %s1 = inlined_call_operand.vmem [shape: f32[2,4,16,16], index: 1, kind: output, shape index: {}]
  $region1: #{custom-call} parent=0
    #allocation0 [shape = 's32[1]{0}', space=sflag, size = 0x4, scoped, tag = 'scoped memory for custom-call']
    %2 = vsyncpa [#allocation0], 0
    %s3 = sshll.u32 %s1, 4
    %s4 = int_to_ptr.vmem [resolvable:$true] %s3
    %6 = dma.hbm_to_vmem [thread:$0]  %s0, 2048, %s4, [#allocation0]
    %7 = dma.done [#allocation0], 2048
    %8 = vsyncpa [#allocation0], 1

// kernel: complex_mse_loss.1
$region0: #{complex_mse_loss.1}
  #allocation0 [shape = 'u32[]', space=smem, size = 0x4, offset = 0x4, fixed_abs, tag = 'smem constant byte address 0x4 - core index']
  #allocation1 [shape = 'u32[144,128]{1,0:T(1,128)}', space=vmem, size = 0x12000, scoped, tag = 'internal scratch']
  #allocation2 [shape = 'f32[32,128]{1,0:T(8,128)}', space=vmem, size = 0x4000, scoped, tag = 'scratch operand']
  %s0 = inlined_call_operand.vmem [shape: f32[64,128], index: 0, kind: input, shape index: {}]
  %s1 = inlined_call_operand.vmem [shape: f32[2,1,1], index: 1, kind: output, shape index: {}]
  %s2 = sld [smem:[#allocation0]]
  $region45: #{complex_mse_loss.1} parent=0
    _
  %s4 = ssub.s32 1, %s2
  %s5 = scalar_select 0, %s4, %s2
  loop: start=0, step=1, limit=4
  $region2: #{complex_mse_loss.1} parent=0 // loop_pre_header
    _
  $region3: #{complex_mse_loss.1} parent=0 // loop_header
    %s7 = sphi 0, %s11
    %p8 = scmp.ge.s32.totalorder %s7, 4
    %s14 = sphi 0, %s26
    %s15 = sphi 0, %s22
    %s16 = sphi 0, %s14
    %s17 = sphi 0, %s15
    %s18 = sphi 0, %s16
    %s19 = sphi 0, %s17
    %s31 = sphi 0, %s33
    %s34 = sphi 0, %s31
    %s35 = sphi 0, %s34
    %s51 = sphi 0, %s35
    %s57 = sphi 0, %s59
    %s60 = sphi 0, %s57
    %s61 = sphi 0, %s60
    %s77 = sphi 0, %s61
  $region4: #{complex_mse_loss.1} parent=0 // loop_header_branch
    %10 = sbr.rel (%p8) target = $region8
  $region5: #{complex_mse_loss.1} parent=0 // loop_body
    %s12 = ssub.s32 %s7, 1
    %s13 = ssub.s32 %s7, 2
    %s20 = sadd.s32 1, %s15
    %p21 = scmp.ge.s32.totalorder %s20, 1
    %s22 = scalar_select %p21, 0, %s20
    %s23 = sadd.s32 1, %s14
    %s24 = scalar_select %p21, %s23, %s14
    %p25 = scmp.ge.s32.totalorder %s24, 2
    %s26 = scalar_select %p25, 0, %s24
    %s27 = sadd.s32 %s14, %s15
    %s28 = sadd.s32 %s26, %s22
    %s29 = ssub.s32 %s27, %s28
    %p30 = scmp.eq.s32.totalorder %s29, 0
    %s32 = sadd.s32 %s31, 1
    %s33 = scalar_select %p30, %s31, %s32
    %p36 = pneg %p30
    %p37 = scmp.eq.s32.totalorder %s7, 1
    %p38 = por %p36, %p37
    %p39 = scmp.ne.s32.totalorder %s31, %s34
    %p40 = scmp.eq.s32.totalorder %s7, 0
    %p41 = por %p39, %p40
    %p42 = scmp.ne.s32.totalorder %s31, %s34
    %p43 = scmp.eq.s32.totalorder %s12, 1
    %p44 = por %p42, %p43
    %p45 = scmp.ne.s32.totalorder %s34, %s35
    %p46 = scmp.eq.s32.totalorder %s12, 0
    %p47 = por %p45, %p46
    %p48 = scmp.ne.s32.totalorder %s34, %s35
    %p49 = scmp.eq.s32.totalorder %s13, 1
    %p50 = por %p48, %p49
    %p52 = scmp.ne.s32.totalorder %s35, %s51
    %p53 = scmp.eq.s32.totalorder %s13, 0
    %p54 = por %p52, %p53
    %s55 = ssub.s32 %s14, %s26
    %p56 = scmp.eq.s32.totalorder %s55, 0
    %s58 = sadd.s32 %s57, 1
    %s59 = scalar_select %p56, %s57, %s58
    %p62 = pneg %p56
    %p63 = scmp.eq.s32.totalorder %s7, 1
    %p64 = por %p62, %p63
    %p65 = scmp.ne.s32.totalorder %s57, %s60
    %p66 = scmp.eq.s32.totalorder %s7, 0
    %p67 = por %p65, %p66
    %p68 = scmp.ne.s32.totalorder %s57, %s60
    %p69 = scmp.eq.s32.totalorder %s12, 1
    %p70 = por %p68, %p69
    %p71 = scmp.ne.s32.totalorder %s60, %s61
    %p72 = scmp.eq.s32.totalorder %s12, 0
    %p73 = por %p71, %p72
    %p74 = scmp.ne.s32.totalorder %s60, %s61
    %p75 = scmp.eq.s32.totalorder %s13, 1
    %p76 = por %p74, %p75
    %p78 = scmp.ne.s32.totalorder %s61, %s77
    %p79 = scmp.eq.s32.totalorder %s13, 0
    %p80 = por %p78, %p79
    %p81 = scmp.le.s32.totalorder 1, %s7
    %p82 = scmp.lt.s32.totalorder %s7, 3
    %p83 = pnand %p81, %p82
    %p84 = pneg %p83
    // Predicated region
    $region9: #{complex_mse_loss.1} parent=5 // pred_check
      _
    $region10: #{complex_mse_loss.1} parent=5 // pred_check_branch
      %86 = sbr.rel (%p83) target = $region12
    $region11: #{complex_mse_loss.1} parent=5 // pred_region
      %s87 = ssub.s32 %s7, 1
    $region12: #{complex_mse_loss.1} parent=5 // pred_fallthru
      _
    %p88 = scmp.lt.s32.totalorder %s7, 2
    // Predicated region
    $region13: #{complex_mse_loss.1} parent=5 // pred_check
      %p89 = pneg %p88
    $region14: #{complex_mse_loss.1} parent=5 // pred_check_branch
      %91 = sbr.rel (%p89) target = $region16
    $region15: #{complex_mse_loss.1} parent=5 // pred_region
      // Predicated region
      $region17: #{complex_mse_loss.1} parent=15 // pred_check
        %p92 = pneg %p41
      $region18: #{complex_mse_loss.1} parent=15 // pred_check_branch
        %94 = sbr.rel (%p92) target = $region20
      $region19: #{complex_mse_loss.1} parent=15 // pred_region
        %s95 = sadd.s32 %s14, %s15
        %s96 = smul.u32 4, %s95
        %p97 = scmp.lt.s32.totalorder %s96, 7
        %s98 = scalar_select %p97, %s96, 7
        %s99 = smul.addr %s98, 8
        %s100 = scalar_lea.vmem %s0, %s99
        %s101 = sadd.s32 %s14, %s15
        %s102 = smul.u32 4, %s101
      $region20: #{complex_mse_loss.1} parent=15 // pred_fallthru
        _
    $region16: #{complex_mse_loss.1} parent=5 // pred_fallthru
      _
    %p103 = scmp.le.s32.totalorder 1, %s7
    %p104 = scmp.lt.s32.totalorder %s7, 3
    %p105 = pnand %p103, %p104
    %p106 = pneg %p105
    // Predicated region
    $region21: #{complex_mse_loss.1} parent=5 // pred_check
      _
    $region22: #{complex_mse_loss.1} parent=5 // pred_check_branch
      %108 = sbr.rel (%p105) target = $region24
    $region23: #{complex_mse_loss.1} parent=5 // pred_region
      %s109 = ssub.s32 %s7, 1
      %s110 = sadd.s32 %s16, %s17
      %s111 = smul.u32 4, %s110
      %p112 = scmp.lt.s32.totalorder %s111, 7
      %s113 = scalar_select %p112, %s111, 7
      %s114 = smul.addr %s113, 8
      %s115 = scalar_lea.vmem %s0, %s114
      %p116 = pneg %p47
      %p117 = pneg %p44
      %p118 = pneg %p73
      %p119 = pneg %p70
      %p120 = scmp.lt.s32.totalorder %s16, 1
      %s121 = scalar_select %p120, %s16, 1
      %s122 = scalar_lea.vmem %s1, %s121
      %s123 = sadd.s32 %s16, %s17
      %s124 = smul.u32 4, %s123
      %p125 = scmp.lt.s32.totalorder %s124, 7
      %s126 = scalar_select %p125, %s124, 7
      %s127 = smul.addr %s126, 8
      %s128 = scalar_lea.vmem %s0, %s127
      %s129 = sadd.s32 %s16, %s17
      %s130 = smul.u32 4, %s129
      %p131 = scmp.lt.s32.totalorder %s16, 1
      %s132 = scalar_select %p131, %s16, 1
      %s133 = scalar_lea.vmem %s1, %s132
      %p134 = scmp.eq.s32.totalorder %s17, 0
      // Predicated region
      $region25: #{complex_mse_loss.1} parent=23 // pred_check
        %p135 = pneg %p134
      $region26: #{complex_mse_loss.1} parent=23 // pred_check_branch
        %137 = sbr.rel (%p135) target = $region28
      $region27: #{complex_mse_loss.1} parent=23 // pred_region
        %138 = vst [vmem:[#allocation2] sm:$0xff] 0.0
        %139 = vst [vmem:[#allocation2 + $0x8] sm:$0xff] 0.0
        %140 = vst [vmem:[#allocation2 + $0x10] sm:$0xff] 0.0
        %141 = vst [vmem:[#allocation2 + $0x18] sm:$0xff] 0.0
      $region28: #{complex_mse_loss.1} parent=23 // pred_fallthru
        _
      %v142 = vld [vmem:[%s128] sm:$0xff]
      %v143 = vld [vmem:[%s128 + $0x8] sm:$0xff]
      %v144 = vld [vmem:[%s128 + $0x10] sm:$0xff]
      %v145 = vld [vmem:[%s128 + $0x18] sm:$0xff]
      %v146 = vld [vmem:[#allocation2] sm:$0xff]
      %v147 = vld [vmem:[#allocation2 + $0x8] sm:$0xff]
      %v148 = vld [vmem:[#allocation2 + $0x10] sm:$0xff]
      %v149 = vld [vmem:[#allocation2 + $0x18] sm:$0xff]
      %v150 = vmul.f32 %v142, %v142
      %v151 = vmul.f32 %v143, %v143
      %v152 = vmul.f32 %v144, %v144
      %v153 = vmul.f32 %v145, %v145
      %v154 = vadd.f32 %v146, %v150
      %v155 = vadd.f32 %v147, %v151
      %v156 = vadd.f32 %v148, %v152
      %v157 = vadd.f32 %v149, %v153
      %158 = vst [vmem:[#allocation2] sm:$0xff] %v154
      %159 = vst [vmem:[#allocation2 + $0x8] sm:$0xff] %v155
      %160 = vst [vmem:[#allocation2 + $0x10] sm:$0xff] %v156
      %161 = vst [vmem:[#allocation2 + $0x18] sm:$0xff] %v157
      // Predicated region
      $region29: #{complex_mse_loss.1} parent=23 // pred_check
        %p162 = pneg %p134
      $region30: #{complex_mse_loss.1} parent=23 // pred_check_branch
        %164 = sbr.rel (%p162) target = $region32
      $region31: #{complex_mse_loss.1} parent=23 // pred_region
        %v165 = vld [vmem:[#allocation2] sm:$0xff]
        %v166 = vld [vmem:[#allocation2 + $0x8] sm:$0xff]
        %v167 = vld [vmem:[#allocation2 + $0x10] sm:$0xff]
        %v168 = vld [vmem:[#allocation2 + $0x18] sm:$0xff]
        %v169 = vadd.f32 %v165, %v166
        %v170 = vadd.f32 %v169, %v167
        %v171 = vadd.f32 %v170, %v168
        %172 = vadd.xlane.f32.xlu0 %v171
        %v173 = vpop.xlane.xlu0 %172
        %v174 = vrot.slane %v173, 4
        %v175 = vadd.f32 %v173, %v174
        %v176 = vrot.slane %v175, 2
        %v177 = vadd.f32 %v175, %v176
        %v178 = vrot.slane %v177, 1
        %v179 = vadd.f32 %v177, %v178
        %s180 = vtos %v179
        %v181 = vstv %s180
        %vm182 = vcmask 0
        %183 = vst.msk [vmem:[%s133] sm:$0x1] %vm182, %v181
      $region32: #{complex_mse_loss.1} parent=23 // pred_fallthru
        _
      %p184 = scmp.lt.s32.totalorder %s16, 1
      %s185 = scalar_select %p184, %s16, 1
      %s186 = scalar_lea.vmem %s1, %s185
      // Predicated region
      $region33: #{complex_mse_loss.1} parent=23 // pred_check
        %p187 = pneg %p70
      $region34: #{complex_mse_loss.1} parent=23 // pred_check_branch
        %189 = sbr.rel (%p187) target = $region36
      $region35: #{complex_mse_loss.1} parent=23 // pred_region
        _
      $region36: #{complex_mse_loss.1} parent=23 // pred_fallthru
        _
    $region24: #{complex_mse_loss.1} parent=5 // pred_fallthru
      _
    %p190 = scmp.le.s32.totalorder 2, %s7
    // Predicated region
    $region37: #{complex_mse_loss.1} parent=5 // pred_check
      %p191 = pneg %p190
    $region38: #{complex_mse_loss.1} parent=5 // pred_check_branch
      %193 = sbr.rel (%p191) target = $region40
    $region39: #{complex_mse_loss.1} parent=5 // pred_region
      %s194 = ssub.s32 %s7, 2
      // Predicated region
      $region41: #{complex_mse_loss.1} parent=39 // pred_check
        %p195 = pneg %p76
      $region42: #{complex_mse_loss.1} parent=39 // pred_check_branch
        %197 = sbr.rel (%p195) target = $region44
      $region43: #{complex_mse_loss.1} parent=39 // pred_region
        %p198 = scmp.lt.s32.totalorder %s18, 1
        %s199 = scalar_select %p198, %s18, 1
        %s200 = scalar_lea.vmem %s1, %s199
      $region44: #{complex_mse_loss.1} parent=39 // pred_fallthru
        _
    $region40: #{complex_mse_loss.1} parent=5 // pred_fallthru
      _
  $region6: #{complex_mse_loss.1} parent=0 // loop_footer
    %s11 = sadd.s32 1, %s7
  $region7: #{complex_mse_loss.1} parent=0 // loop_footer_branch
    %6 = sbr.rel target = $region3
  $region8: #{complex_mse_loss.1} parent=0 // loop_exit
    _

</llo_original>
